<compile_context>
chip_gen: v7x
topology: tpu7x:2x2x1
jax: 0.10.0
libtpu: 0.0.40
codegen_flags: <defaults>
</compile_context>

<pallas_src>
import functools
import math

import jax
import jax.numpy as jnp
from jax.experimental import pallas as pl
from jax.experimental.pallas import tpu as pltpu

LANES = 128
TILE_ROWS = 1024                       # 1024 x 128 x 4B = 512 KiB per f32 block
VMEM_BUDGET_BYTES = 16 * 1024 * 1024   # conservative (v7x scoped VMEM = 32 MiB)

# TODO(synk): the pos_weight != None branch of BalancedCrossEntropyLoss is not
# implemented (the module default, pos_weight=None, is what is reproduced).


def _bce_partials_kernel(*refs, has_void):
    """Per-block partial sums for the balanced BCE loss.

    out block layout (1, NACC, 1, 128) float32:
      slot 0: sum(labels)                                 -> num_pos
      slot 1: sum(L),  L = -loss_val * w_void             -> loss_pos + loss_neg
      slot 2: sum(labels * L)                             -> loss_pos
      slot 3: sum(void >= 0.5)   (void path only)
    """
    if has_void:
        x_ref, lbl_ref, void_ref, out_ref = refs
    else:
        x_ref, lbl_ref, out_ref = refs
        void_ref = None

    x = x_ref[...].astype(jnp.float32)
    lbl = lbl_ref[...].astype(jnp.float32)

    labels = (lbl >= 0.5).astype(jnp.float32)
    gez = (x >= 0.0).astype(jnp.float32)
    # Numerically-stable BCE-with-logits: x*(labels - [x>=0]) - log(1+exp(-|x|)).
    # (x - 2*x*[x>=0] == -|x| in the PyTorch expression.)  jnp.log(1+.) is used
    # instead of log1p for guaranteed Mosaic lowering; difference is <= 1 ulp.
    loss_val = x * (labels - gez) - jnp.log(1.0 + jnp.exp(-jnp.abs(x)))

    if has_void:
        void = void_ref[...].astype(jnp.float32)
        w_void = (void <= 0.5).astype(jnp.float32)
        L = -loss_val * w_void
    else:
        L = -loss_val

    out_ref[0, 0] = jnp.sum(labels, axis=0, keepdims=True)
    out_ref[0, 1] = jnp.sum(L, axis=0, keepdims=True)
    out_ref[0, 2] = jnp.sum(labels * L, axis=0, keepdims=True)
    if has_void:
        out_ref[0, 3] = jnp.sum((void >= 0.5).astype(jnp.float32),
                                axis=0, keepdims=True)


def balanced_bce_loss(output, label, void_pixels=None,
                      size_average=True, batch_average=True,
                      tile_rows=TILE_ROWS):
    """Pallas TPU implementation of BalancedCrossEntropyLoss.forward."""
    assert output.shape == label.shape
    has_void = void_pixels is not None
    if has_void:
        assert void_pixels.shape == label.shape

    shape = label.shape
    total = int(math.prod(shape))
    n_inputs = 3 if has_void else 2

    # VMEM budget: n_inputs * 2 pipeline buffers * block (worst case 4B/elem).
    while tile_rows > 8 and n_inputs * 2 * tile_rows * LANES * 4 > VMEM_BUDGET_BYTES:
        tile_rows //= 2

    rows_min = pl.cdiv(total, LANES)
    tr = min(tile_rows, rows_min)
    tr = max(8, ((tr + 7) // 8) * 8)           # sublane dim multiple of 8
    n_blocks = pl.cdiv(rows_min, tr)
    rows = n_blocks * tr
    pad = rows * LANES - total                 # statically known

    def prep(v, pad_value):
        flat = v.reshape(-1)                   # native dtype, no upcast
        if pad > 0:
            flat = jnp.pad(flat, (0, pad), constant_values=pad_value)
        return flat.reshape(rows, LANES)

    inputs = [prep(output, 0), prep(label, 0)]
    if has_void:
        inputs.append(prep(void_pixels, 1))    # padded tail counts as void
    nacc = 4 if has_void else 3

    in_bytes = sum(int(v.size) * v.dtype.itemsize for v in inputs)
    out_bytes = n_blocks * nacc * LANES * 4

    tile_spec = pl.BlockSpec((tr, LANES), lambda i: (i, 0))
    partials = pl.pallas_call(
        functools.partial(_bce_partials_kernel, has_void=has_void),
        out_shape=jax.ShapeDtypeStruct((n_blocks, nacc, 1, LANES), jnp.float32),
        grid=(n_blocks,),
        in_specs=[tile_spec] * n_inputs,
        out_specs=pl.BlockSpec((1, nacc, 1, LANES), lambda i: (i, 0, 0, 0)),
        compiler_params=pltpu.CompilerParams(
            dimension_semantics=("parallel",)),
        cost_estimate=pl.CostEstimate(
            flops=12 * rows * LANES,
            transcendentals=2 * rows * LANES,
            bytes_accessed=in_bytes + out_bytes),
    )(*inputs)

    # Tiny final combine in JAX (keeps the grid fully parallel on v7x megacore).
    sums = jnp.sum(partials, axis=(0, 2, 3))
    num_pos = sums[0]
    num_neg = jnp.float32(total) - num_pos           # sum(1 - labels) over real elems
    loss_pos = sums[2]
    if has_void:
        sum_L = sums[1]                              # pads are "void" -> contribute 0
        void_cnt = sums[3] - jnp.float32(pad)        # drop padded void pixels
        num_total = num_pos + num_neg - void_cnt
    else:
        # each padded element (x=0, label=0) contributes exactly log(2) to sum_L
        sum_L = sums[1] - jnp.float32(pad * math.log(2.0))
        num_total = num_pos + num_neg
    loss_neg = sum_L - loss_pos
    w = num_neg / num_total
    final = w * loss_pos + (1.0 - w) * loss_neg
    if size_average:
        final = final / jnp.float32(total)
    elif batch_average:
        final = final / jnp.float32(shape[0])
    return final


class PADNetLoss:
    """JAX/Pallas port of mtl_loss_schemes.PADNetLoss.forward."""

    def __init__(self, tasks, auxilary_tasks, loss_ft, loss_weights):
        self.tasks = tasks
        self.auxilary_tasks = auxilary_tasks
        self.loss_ft = loss_ft
        self.loss_weights = loss_weights

    def __call__(self, pred, gt):
        total = jnp.float32(0.0)
        out = {}
        img_size = gt[self.tasks[0]].shape[-2:]
        for task in self.auxilary_tasks:
            # TODO(synk): bilinear upsampling done with jax.image.resize
            # (align_corners=False semantics), not as a Pallas kernel.
            p = pred['initial_%s' % task]
            p_ = jax.image.resize(p, p.shape[:2] + tuple(img_size),
                                  method='bilinear')
            loss_ = self.loss_ft[task](p_, gt[task])
            out['deepsup_%s' % task] = loss_
            total = total + self.loss_weights[task] * loss_
        for task in self.tasks:
            loss_ = self.loss_ft[task](pred[task], gt[task])
            out[task] = loss_
            total = total + self.loss_weights[task] * loss_
        out['total'] = total
        return out['total'], out


def _reference_bce(output, label, void_pixels=None,
                   size_average=True, batch_average=True):
    output = output.astype(jnp.float32)
    label = label.astype(jnp.float32)
    labels = (label >= 0.5).astype(jnp.float32)
    num_pos = jnp.sum(labels)
    num_neg = jnp.sum(1.0 - labels)
    num_total = num_pos + num_neg
    w = num_neg / num_total
    gez = (output >= 0.0).astype(jnp.float32)
    loss_val = output * (labels - gez) - jnp.log(
        1.0 + jnp.exp(output - 2.0 * output * gez))
    lp = -labels * loss_val
    ln = -(1.0 - labels) * loss_val
    if void_pixels is not None:
        vp = void_pixels.astype(jnp.float32)
        wv = (vp <= 0.5).astype(jnp.float32)
        lp = wv * lp
        ln = wv * ln
        num_total = num_total - jnp.sum((vp >= 0.5).astype(jnp.float32))
        w = num_neg / num_total
    final = w * jnp.sum(lp) + (1.0 - w) * jnp.sum(ln)
    if size_average:
        final = final / float(math.prod(label.shape))
    elif batch_average:
        final = final / label.shape[0]
    return final


if __name__ == "__main__":
    key = jax.random.PRNGKey(0)
    k = jax.random.split(key, 6)

    # PADNet-style inputs (NCHW): one task ("edge") with deep supervision.
    img_hw = (16, 16)
    pred = {
        "edge": jax.random.normal(k[0], (2, 1, 16, 16), jnp.float32) * 2.0,
        "initial_edge": jax.random.normal(k[1], (2, 1, 8, 8), jnp.float32) * 2.0,
    }
    gt = {"edge": (jax.random.uniform(k[2], (2, 1, 16, 16)) > 0.7)
          .astype(jnp.float32)}

    model = PADNetLoss(tasks=["edge"], auxilary_tasks=["edge"],
                       loss_ft={"edge": balanced_bce_loss},
                       loss_weights={"edge": 1.0})
    total, out = model(pred, gt)
    total = jax.block_until_ready(total)

    # pure-JAX reference of the whole PADNetLoss forward
    p_up = jax.image.resize(pred["initial_edge"], (2, 1) + img_hw,
                            method="bilinear")
    ref_total = (_reference_bce(p_up, gt["edge"])
                 + _reference_bce(pred["edge"], gt["edge"]))
    assert jnp.allclose(total, ref_total, rtol=1e-4, atol=1e-5), (total, ref_total)

    # standalone BCE kernel checks: ragged (padded) size, bf16 logits, void path
    shape = (2, 3, 13, 17)        # 1326 elements -> exercises the pad correction
    x = (jax.random.normal(k[3], shape, jnp.float32) * 2.0).astype(jnp.bfloat16)
    lbl = (jax.random.uniform(k[4], shape) > 0.6).astype(jnp.float32)
    void = (jax.random.uniform(k[5], shape) > 0.85).astype(jnp.float32)

    lv = jax.block_until_ready(balanced_bce_loss(x, lbl, void_pixels=void))
    ref_v = _reference_bce(x.astype(jnp.float32), lbl, void_pixels=void)
    assert jnp.allclose(lv, ref_v, rtol=1e-4, atol=1e-5), (lv, ref_v)

    ln_ = jax.block_until_ready(balanced_bce_loss(x, lbl))
    ref_n = _reference_bce(x.astype(jnp.float32), lbl)
    assert jnp.allclose(ln_, ref_n, rtol=1e-4, atol=1e-5), (ln_, ref_n)

    print("KERNEL_OK")
</pallas_src>

<mosaic_0001>
module attributes {stable_mosaic.version = 11 : i64} {
  func.func @_bce_partials_kernel(%arg0: i32, %arg1: memref<8x128xf32, #tpu.memory_space<vmem>>, %arg2: memref<8x128xf32, #tpu.memory_space<vmem>>, %arg3: memref<1x3x1x128xf32, #tpu.memory_space<vmem>>) attributes {dimension_semantics = [#tpu.dimension_semantics<parallel>], iteration_bounds = array<i64: 1>, scalar_prefetch = 0 : i64, scratch_operands = 0 : i64, tpu.core_type = #tpu.core_type<tc>, window_params = [{transform_indices = @transform_0, window_bounds = array<i64: 8, 128>}, {transform_indices = @transform_1, window_bounds = array<i64: 8, 128>}, {transform_indices = @transform_2, window_bounds = array<i64: 1, 3, 1, 128>}]} {
    %c0 = arith.constant 0 : index
    %c0_0 = arith.constant 0 : index
    %0 = vector.load %arg1[%c0, %c0_0] : memref<8x128xf32, #tpu.memory_space<vmem>>, vector<8x128xf32>
    %c0_1 = arith.constant 0 : index
    %c0_2 = arith.constant 0 : index
    %1 = vector.load %arg2[%c0_1, %c0_2] : memref<8x128xf32, #tpu.memory_space<vmem>>, vector<8x128xf32>
    %cst = arith.constant 5.000000e-01 : f32
    %2 = vector.broadcast %cst : f32 to vector<8x128xf32>
    %3 = arith.cmpf oge, %1, %2 : vector<8x128xf32>
    %4 = arith.extui %3 : vector<8x128xi1> to vector<8x128xi32>
    %5 = arith.sitofp %4 : vector<8x128xi32> to vector<8x128xf32>
    %cst_3 = arith.constant 0.000000e+00 : f32
    %6 = vector.broadcast %cst_3 : f32 to vector<8x128xf32>
    %7 = arith.cmpf oge, %0, %6 : vector<8x128xf32>
    %8 = arith.extui %7 : vector<8x128xi1> to vector<8x128xi32>
    %9 = arith.sitofp %8 : vector<8x128xi32> to vector<8x128xf32>
    %10 = arith.subf %5, %9 : vector<8x128xf32>
    %11 = arith.mulf %0, %10 : vector<8x128xf32>
    %12 = math.absf %0 : vector<8x128xf32>
    %cst_4 = arith.constant 0.000000e+00 : f32
    %13 = vector.broadcast %cst_4 : f32 to vector<8x128xf32>
    %14 = arith.subf %13, %12 : vector<8x128xf32>
    %15 = math.exp %14 : vector<8x128xf32>
    %cst_5 = arith.constant 1.000000e+00 : f32
    %16 = vector.broadcast %cst_5 : f32 to vector<8x128xf32>
    %17 = arith.addf %16, %15 : vector<8x128xf32>
    %18 = math.log %17 : vector<8x128xf32>
    %19 = arith.subf %11, %18 : vector<8x128xf32>
    %cst_6 = arith.constant 0.000000e+00 : f32
    %20 = vector.broadcast %cst_6 : f32 to vector<8x128xf32>
    %21 = arith.subf %20, %19 : vector<8x128xf32>
    %cst_7 = arith.constant dense<0.000000e+00> : vector<128xf32>
    %22 = vector.multi_reduction <add>, %5, %cst_7 [0] : vector<8x128xf32> to vector<128xf32>
    %23 = vector.shape_cast %22 : vector<128xf32> to vector<1x128xf32>
    %c0_8 = arith.constant 0 : index
    %c0_9 = arith.constant 0 : index
    %c0_10 = arith.constant 0 : index
    %c0_11 = arith.constant 0 : index
    %24 = vector.load %arg3[%c0_8, %c0_9, %c0_10, %c0_11] : memref<1x3x1x128xf32, #tpu.memory_space<vmem>>, vector<1x1x1x128xf32>
    %25 = vector.shape_cast %24 : vector<1x1x1x128xf32> to vector<1x128xf32>
    %26 = vector.shape_cast %23 : vector<1x128xf32> to vector<1x1x1x128xf32>
    tpu.vector_store %arg3[%c0_8, %c0_9, %c0_10, %c0_11], %26 {strides = array<i32>} : memref<1x3x1x128xf32, #tpu.memory_space<vmem>>, vector<1x1x1x128xf32>,
    %cst_12 = arith.constant dense<0.000000e+00> : vector<128xf32>
    %27 = vector.multi_reduction <add>, %21, %cst_12 [0] : vector<8x128xf32> to vector<128xf32>
    %28 = vector.shape_cast %27 : vector<128xf32> to vector<1x128xf32>
    %c0_13 = arith.constant 0 : index
    %c1 = arith.constant 1 : index
    %c0_14 = arith.constant 0 : index
    %c0_15 = arith.constant 0 : index
    %29 = vector.load %arg3[%c0_13, %c1, %c0_14, %c0_15] : memref<1x3x1x128xf32, #tpu.memory_space<vmem>>, vector<1x1x1x128xf32>
    %30 = vector.shape_cast %29 : vector<1x1x1x128xf32> to vector<1x128xf32>
    %31 = vector.shape_cast %28 : vector<1x128xf32> to vector<1x1x1x128xf32>
    tpu.vector_store %arg3[%c0_13, %c1, %c0_14, %c0_15], %31 {strides = array<i32>} : memref<1x3x1x128xf32, #tpu.memory_space<vmem>>, vector<1x1x1x128xf32>,
    %32 = arith.mulf %5, %21 : vector<8x128xf32>
    %cst_16 = arith.constant dense<0.000000e+00> : vector<128xf32>
    %33 = vector.multi_reduction <add>, %32, %cst_16 [0] : vector<8x128xf32> to vector<128xf32>
    %34 = vector.shape_cast %33 : vector<128xf32> to vector<1x128xf32>
    %c0_17 = arith.constant 0 : index
    %c2 = arith.constant 2 : index
    %c0_18 = arith.constant 0 : index
    %c0_19 = arith.constant 0 : index
    %35 = vector.load %arg3[%c0_17, %c2, %c0_18, %c0_19] : memref<1x3x1x128xf32, #tpu.memory_space<vmem>>, vector<1x1x1x128xf32>
    %36 = vector.shape_cast %35 : vector<1x1x1x128xf32> to vector<1x128xf32>
    %37 = vector.shape_cast %34 : vector<1x128xf32> to vector<1x1x1x128xf32>
    tpu.vector_store %arg3[%c0_17, %c2, %c0_18, %c0_19], %37 {strides = array<i32>} : memref<1x3x1x128xf32, #tpu.memory_space<vmem>>, vector<1x1x1x128xf32>,
    return
  }
  func.func @transform_0(%arg0: i32) -> (i32, i32) {
    %c0_i32 = arith.constant 0 : i32
    %c0_i32_0 = arith.constant 0 : i32
    return %arg0, %c0_i32 : i32, i32
  }
  func.func @transform_1(%arg0: i32) -> (i32, i32) {
    %c0_i32 = arith.constant 0 : i32
    %c0_i32_0 = arith.constant 0 : i32
    return %arg0, %c0_i32 : i32, i32
  }
  func.func @transform_2(%arg0: i32) -> (i32, i32, i32, i32) {
    %c0_i32 = arith.constant 0 : i32
    %c0_i32_0 = arith.constant 0 : i32
    %c0_i32_1 = arith.constant 0 : i32
    %c0_i32_2 = arith.constant 0 : i32
    return %arg0, %c0_i32, %c0_i32_0, %c0_i32_1 : i32, i32, i32, i32
  }
}

</mosaic_0001>

<llo_original>
// kernel: tpu_custom_call.1
$region0: #{tpu_custom_call.1}
  #allocation0 [shape = 'u32[]', space=smem, size = 0x4, offset = 0x4, fixed_abs, tag = 'smem constant byte address 0x4 - core index']
  #allocation1 [shape = 'u32[144,128]{1,0:T(1,128)}', space=vmem, size = 0x12000, scoped, tag = 'internal scratch']
  %s0 = inlined_call_operand.hbm [shape: f32[8,128], index: 0, kind: input, shape index: {}]
  %s1 = inlined_call_operand.hbm [shape: f32[8,128], index: 1, kind: input, shape index: {}]
  %s2 = inlined_call_operand.hbm [shape: f32[1,3,1,128], index: 2, kind: output, shape index: {}]
  %s3 = sld [smem:[#allocation0]]
  $region26: #{tpu_custom_call.1} parent=0
    _
  %s5 = ssub.s32 1, %s3
  %s6 = scalar_select 0, %s5, %s3
  $region1: #{tpu_custom_call.1} parent=0
    #allocation2 [shape = 'u8[4096]{0}', space=vmem, size = 0x1000, scoped, tag = 'input window, operand 0, single buffered']
    #allocation3 [shape = 's32[1]{0}', space=sflag, size = 0x4, scoped, tag = 'scoped memory for tpu_custom_call.1']
    #allocation4 [shape = 's32[1]{0}', space=sflag, size = 0x4, scoped, tag = 'scoped memory for tpu_custom_call.1']
    #allocation5 [shape = 'u8[4096]{0}', space=vmem, size = 0x1000, scoped, tag = 'input window, operand 1, single buffered']
    #allocation6 [shape = 's32[1]{0}', space=sflag, size = 0x4, scoped, tag = 'scoped memory for tpu_custom_call.1']
    #allocation7 [shape = 'u8[1536]{0}', space=vmem, size = 0x800, scoped, tag = 'output window, operand 0, single buffered']
    %7 = vsyncpa [#allocation3], 0
    %8 = vsyncpa [#allocation6], 0
    %9 = vsyncpa [#allocation4], 0
    // Predicated region
    $region2: #{tpu_custom_call.1} parent=1 // pred_check
      _
    $region3: #{tpu_custom_call.1} parent=1 // pred_check_branch
      %11 = sbr.rel (0) target = $region5
    $region4: #{tpu_custom_call.1} parent=1 // pred_region
      %s13 = ssub.s32 128, 128
      %14 = vsyncadd [#allocation3], %s13
      %s16 = sshll.u32 [#allocation2], 4
      %s17 = int_to_ptr.vmem [resolvable:$true] %s16
      %19 = dma.hbm_to_vmem [thread:$0]  %s0, 128, %s17, [#allocation3]
    $region5: #{tpu_custom_call.1} parent=1 // pred_fallthru
      _
    // Predicated region
    $region6: #{tpu_custom_call.1} parent=1 // pred_check
      _
    $region7: #{tpu_custom_call.1} parent=1 // pred_check_branch
      %21 = sbr.rel (0) target = $region9
    $region8: #{tpu_custom_call.1} parent=1 // pred_region
      %s23 = ssub.s32 128, 128
      %24 = vsyncadd [#allocation6], %s23
      %s26 = sshll.u32 [#allocation5], 4
      %s27 = int_to_ptr.vmem [resolvable:$true] %s26
      %29 = dma.hbm_to_vmem [thread:$0]  %s1, 128, %s27, [#allocation6]
    $region9: #{tpu_custom_call.1} parent=1 // pred_fallthru
      _
    // Predicated region
    $region10: #{tpu_custom_call.1} parent=1 // pred_check
      _
    $region11: #{tpu_custom_call.1} parent=1 // pred_check_branch
      %31 = sbr.rel (0) target = $region13
    $region12: #{tpu_custom_call.1} parent=1 // pred_region
      %32 = dma.done [#allocation3], 128
    $region13: #{tpu_custom_call.1} parent=1 // pred_fallthru
      _
    // Predicated region
    $region14: #{tpu_custom_call.1} parent=1 // pred_check
      _
    $region15: #{tpu_custom_call.1} parent=1 // pred_check_branch
      %34 = sbr.rel (0) target = $region17
    $region16: #{tpu_custom_call.1} parent=1 // pred_region
      %35 = dma.done [#allocation6], 128
    $region17: #{tpu_custom_call.1} parent=1 // pred_fallthru
      _
    %v36 = vld [vmem:[#allocation2] sm:$0xff]
    %v37 = vld [vmem:[#allocation5] sm:$0xff]
    %vm38 = vcmp.ge.f32.partialorder %v37, 0.5
    %v39 = vsel %vm38, 1, 0
    %v40 = vcvt.s32.f32 %v39
    %vm41 = vcmp.ge.f32.partialorder %v36, 0.0
    %v42 = vsel %vm41, 1, 0
    %v43 = vcvt.s32.f32 %v42
    %v44 = vsub.f32 %v40, %v43
    %v45 = vmul.f32 %v36, %v44
    %v46 = vand.u32 2147483647, %v36
    %v47 = vsub.f32 0.0, %v46
    %v48 = vmul.f32 %v47, 1.442695
    %v49 = vpow.pop %v48
    %v50 = vadd.f32 %v49, 1.0
    %v51 = vlog2.pop %v50
    %v52 = vmul.f32 %v51, 0.6931472
    %v53 = vsub.f32 %v45, %v52
    %v54 = vsub.f32 0.0, %v53
    %v55 = vrot.slane %v40, 4
    %v56 = vadd.f32 %v40, %v55
    %v57 = vrot.slane %v56, 2
    %v58 = vadd.f32 %v56, %v57
    %v59 = vrot.slane %v58, 1
    %v60 = vadd.f32 %v58, %v59
    %61 = vst [vmem:[#allocation7] sm:$0x1] %v60
    %v62 = vrot.slane %v54, 4
    %v63 = vadd.f32 %v54, %v62
    %v64 = vrot.slane %v63, 2
    %v65 = vadd.f32 %v63, %v64
    %v66 = vrot.slane %v65, 1
    %v67 = vadd.f32 %v65, %v66
    %s68 = scalar_lea.vmem [#allocation7], 1
    %69 = vst [vmem:[%s68] sm:$0x1] %v67
    %v70 = vmul.f32 %v40, %v54
    %v71 = vrot.slane %v70, 4
    %v72 = vadd.f32 %v70, %v71
    %v73 = vrot.slane %v72, 2
    %v74 = vadd.f32 %v72, %v73
    %v75 = vrot.slane %v74, 1
    %v76 = vadd.f32 %v74, %v75
    %s77 = scalar_lea.vmem [#allocation7], 2
    %78 = vst [vmem:[%s77] sm:$0x1] %v76
    // Predicated region
    $region18: #{tpu_custom_call.1} parent=1 // pred_check
      _
    $region19: #{tpu_custom_call.1} parent=1 // pred_check_branch
      %80 = sbr.rel (0) target = $region21
    $region20: #{tpu_custom_call.1} parent=1 // pred_region
      %s82 = ssub.s32 48, 48
      %83 = vsyncadd [#allocation4], %s82
      %s84 = sshll.u32 [#allocation7], 4
      %s85 = int_to_ptr.vmem [resolvable:$true] %s84
      %90 = dma.vmem_to_hbm [thread:$0]  %s85, 48, %s2, [#allocation4], 16, 16, 1
    $region21: #{tpu_custom_call.1} parent=1 // pred_fallthru
      _
    // Predicated region
    $region22: #{tpu_custom_call.1} parent=1 // pred_check
      _
    $region23: #{tpu_custom_call.1} parent=1 // pred_check_branch
      %92 = sbr.rel (0) target = $region25
    $region24: #{tpu_custom_call.1} parent=1 // pred_region
      %93 = dma.done [#allocation4], 48
    $region25: #{tpu_custom_call.1} parent=1 // pred_fallthru
      _
    %94 = vsyncpa [#allocation3], 1
    %95 = vsyncpa [#allocation6], 1
    %96 = vsyncpa [#allocation4], 1

</llo_original>
